<compile_context>
chip_gen: v7x
topology: tpu7x:2x2x1
jax: 0.10.0
libtpu: 0.0.40
codegen_flags: <defaults>
</compile_context>

<pallas_src>
import functools

import jax
import jax.numpy as jnp
from jax.experimental import pallas as pl
from jax.experimental.pallas import tpu as pltpu


def _round_up(x, m):
    return ((x + m - 1) // m) * m


def _vmem_capacity_bytes():
    """Generation-aware VMEM size; conservative fallback if the query fails."""
    try:
        return int(pltpu.get_tpu_info().vmem_capacity_bytes)
    except Exception:
        return 64 * 1024 * 1024  # v7x per-TC VMEM (smallest of the three gens)


# --------------------------------------------------------------------------- #
# Kernels
# --------------------------------------------------------------------------- #
def _linear_kernel_f32out(x_ref, w_ref, o_ref):
    # x_ref: [tm, tk]  w_ref: [tk, tn]  o_ref: [tm, tn] (f32, resident across k)
    k = pl.program_id(2)

    @pl.when(k == 0)
    def _():
        o_ref[...] = jnp.zeros_like(o_ref)

    o_ref[...] += jnp.dot(x_ref[...], w_ref[...], preferred_element_type=jnp.float32)


def _linear_kernel_acc(x_ref, w_ref, o_ref, acc_ref):
    # Same as above but with an f32 scratch accumulator for non-f32 outputs.
    k = pl.program_id(2)

    @pl.when(k == 0)
    def _():
        acc_ref[...] = jnp.zeros_like(acc_ref)

    acc_ref[...] += jnp.dot(x_ref[...], w_ref[...], preferred_element_type=jnp.float32)

    @pl.when(k == pl.num_programs(2) - 1)
    def _():
        o_ref[...] = acc_ref[...].astype(o_ref.dtype)


# --------------------------------------------------------------------------- #
# Tiling heuristics (N/K tiles are fixed at weight-prep time)
# --------------------------------------------------------------------------- #
def _choose_nk_tiles(N, K, itemsize, vmem_cap, expect_single_m_block):
    Np0 = _round_up(N, 128)
    Kp0 = _round_up(K, 128)

    tn = min(1024, Np0)
    # If M will be a single block, keep >= 2 N blocks (when N allows) so the
    # parallel grid axes can still shard across both v7x TensorCores.
    if expect_single_m_block and Np0 >= 256:
        tn = min(tn, _round_up((Np0 + 1) // 2, 128))

    # Larger K tiles => fewer grid steps / fewer accumulator RMW passes.
    tk = min(2048 if itemsize <= 2 else 1024, Kp0)

    budget = int(0.55 * vmem_cap)
    tm_est = 512  # worst-case M tile used only for the footprint estimate

    def footprint(tn_, tk_):
        return (2 * (tm_est * tk_ + tk_ * tn_) * itemsize   # double-buffered x & w
                + 2 * tm_est * tn_ * 4                      # double-buffered out (f32)
                + tm_est * tn_ * 4)                         # acc scratch (worst case)

    while footprint(tn, tk) > budget and (tn > 128 or tk > 128):
        if tk >= tn and tk > 128:
            tk = max(128, tk // 2)
        elif tn > 128:
            tn = max(128, tn // 2)
        else:
            break
    return tn, tk


# --------------------------------------------------------------------------- #
# Forward
# --------------------------------------------------------------------------- #
@functools.partial(
    jax.jit, static_argnames=("N", "K", "tn", "tk", "compute_dtype", "vmem_cap")
)
def _linear_forward(x, w_prep, *, N, K, tn, tk, compute_dtype, vmem_cap):
    """x: [B, ...] with prod(trailing dims) == K;  w_prep: [Kp, Np] pre-transposed,
    pre-cast, pre-padded weight.  Returns [B, N] in x.dtype."""
    B = x.shape[0]
    flat = 1
    for s in x.shape[1:]:
        flat *= s
    assert flat == K, f"flattened feature dim {flat} != weight input dim {K}"

    out_dtype = jnp.dtype(x.dtype)
    compute_dtype = jnp.dtype(compute_dtype)
    Kp, Np = w_prep.shape

    # Hot path touches only the (small) activation: flatten, cast, pad.
    x2d = x.reshape(B, K).astype(compute_dtype)
    tm = min(512, _round_up(B, 8))
    Mp = _round_up(B, tm)
    if (Mp, Kp) != (B, K):
        x2d = jnp.pad(x2d, ((0, Mp - B), (0, Kp - K)))

    grid = (Mp // tm, Np // tn, Kp // tk)

    itemsize = compute_dtype.itemsize
    out_itemsize = out_dtype.itemsize
    use_acc = out_dtype != jnp.dtype(jnp.float32)

    footprint = 2 * (tm * tk + tk * tn) * itemsize + 2 * tm * tn * out_itemsize
    if use_acc:
        footprint += tm * tn * 4
    vmem_limit = min(int(0.85 * vmem_cap), max(footprint + (8 << 20), 32 << 20))

    # bytes_accessed includes the re-streaming factor of each operand.
    cost = pl.CostEstimate(
        flops=2 * Mp * Kp * Np,
        transcendentals=0,
        bytes_accessed=((Mp // tm) * Np * Kp + (Np // tn) * Mp * Kp) * itemsize
        + Mp * Np * out_itemsize,
    )

    kernel = _linear_kernel_acc if use_acc else _linear_kernel_f32out
    scratch = [pltpu.VMEM((tm, tn), jnp.float32)] if use_acc else []

    out_padded = pl.pallas_call(
        kernel,
        out_shape=jax.ShapeDtypeStruct((Mp, Np), out_dtype),
        grid_spec=pltpu.PrefetchScalarGridSpec(
            num_scalar_prefetch=0,
            grid=grid,
            in_specs=[
                pl.BlockSpec((tm, tk), lambda i, j, k: (i, k)),  # activations [M, K]
                pl.BlockSpec((tk, tn), lambda i, j, k: (k, j)),  # weight.T    [K, N]
            ],
            out_specs=pl.BlockSpec((tm, tn), lambda i, j, k: (i, j)),
            scratch_shapes=scratch,
        ),
        compiler_params=pltpu.CompilerParams(
            dimension_semantics=("parallel", "parallel", "arbitrary"),
            vmem_limit_bytes=vmem_limit,
        ),
        cost_estimate=cost,
    )(x2d, w_prep)

    return out_padded[:B, :N]


def make_linear(weight, compute_dtype=None, batch_hint=8):
    """Prepare the weight ONCE (cast -> transpose to [K, N] -> pad to tile multiples)
    and return a forward(x) callable.  weight: [output_dim, input_dim] (nn.Linear)."""
    N, K = weight.shape
    compute_dtype = jnp.dtype(compute_dtype if compute_dtype is not None else weight.dtype)
    vmem_cap = _vmem_capacity_bytes()

    expect_single_m_block = _round_up(max(int(batch_hint), 1), 8) <= 512
    tn, tk = _choose_nk_tiles(N, K, compute_dtype.itemsize, vmem_cap,
                              expect_single_m_block)
    Np = _round_up(N, tn)
    Kp = _round_up(K, tk)

    # One-time weight prep, kept resident as a concrete device array.
    w_prep = jnp.pad(weight.T.astype(compute_dtype), ((0, Kp - K), (0, Np - N)))
    w_prep = jax.block_until_ready(jax.device_put(w_prep))

    def forward(x):
        return _linear_forward(
            x, w_prep, N=N, K=K, tn=tn, tk=tk,
            compute_dtype=compute_dtype, vmem_cap=vmem_cap,
        )

    return forward


if __name__ == "__main__":
    # Module defaults: input_dim = 28*28 = 784, output_dim = 10, R unused in forward.
    # TODO(synk): project() (weight-norm clipping) is a training-time op, not forward.
    input_dim = 28 * 28
    output_dim = 10
    batch = 2

    key = jax.random.PRNGKey(0)
    kx, kw = jax.random.split(key)

    x = jax.random.normal(kx, (batch, 1, 28, 28), dtype=jnp.float32)
    bound = 1.0 / (input_dim ** 0.5)  # mimic nn.Linear default uniform init range
    weight = jax.random.uniform(
        kw, (output_dim, input_dim), minval=-bound, maxval=bound, dtype=jnp.float32
    )

    ref = x.reshape(batch, -1) @ weight.T

    # f32 path: accumulates directly into the resident output block (no scratch).
    lin_f32 = make_linear(weight, batch_hint=batch)
    out_f32 = jax.block_until_ready(lin_f32(x))
    assert out_f32.shape == (batch, output_dim)
    assert jnp.allclose(out_f32, ref, atol=1e-4, rtol=1e-4)

    # bf16-on-MXU path (bf16 operands + output, f32 accumulation via VMEM scratch).
    lin_bf16 = make_linear(weight, compute_dtype=jnp.bfloat16, batch_hint=batch)
    out_bf16 = jax.block_until_ready(lin_bf16(x.astype(jnp.bfloat16)))
    assert out_bf16.shape == (batch, output_dim)
    assert jnp.allclose(out_bf16.astype(jnp.float32), ref, atol=1e-1, rtol=1e-1)

    print("KERNEL_OK")
</pallas_src>

<mosaic_0001>
module attributes {stable_mosaic.version = 11 : i64} {
  func.func @_linear_kernel_f32out(%arg0: i32, %arg1: i32, %arg2: i32, %arg3: memref<8x896xf32, #tpu.memory_space<vmem>>, %arg4: memref<896x128xf32, #tpu.memory_space<vmem>>, %arg5: memref<8x128xf32, #tpu.memory_space<vmem>>) attributes {dimension_semantics = [#tpu.dimension_semantics<parallel>, #tpu.dimension_semantics<parallel>, #tpu.dimension_semantics<arbitrary>], iteration_bounds = array<i64: 1, 1, 1>, scalar_prefetch = 0 : i64, scratch_operands = 0 : i64, tpu.core_type = #tpu.core_type<tc>, window_params = [{transform_indices = @transform_0, window_bounds = array<i64: 8, 896>}, {transform_indices = @transform_1, window_bounds = array<i64: 896, 128>}, {transform_indices = @transform_2, window_bounds = array<i64: 8, 128>}]} {
    %c0_i32 = arith.constant 0 : i32
    %0 = arith.cmpi eq, %arg2, %c0_i32 : i32
    %1 = arith.extui %0 : i1 to i32
    %c0_i32_0 = arith.constant 0 : i32
    %2 = arith.cmpi ne, %1, %c0_i32_0 : i32
    scf.if %2 {
      %cst_8 = arith.constant 0.000000e+00 : f32
      %9 = vector.broadcast %cst_8 : f32 to vector<8x128xf32>
      %c0_9 = arith.constant 0 : index
      %c0_10 = arith.constant 0 : index
      %10 = vector.load %arg5[%c0_9, %c0_10] : memref<8x128xf32, #tpu.memory_space<vmem>>, vector<8x128xf32>
      tpu.vector_store %arg5[%c0_9, %c0_10], %9 {strides = array<i32>} : memref<8x128xf32, #tpu.memory_space<vmem>>, vector<8x128xf32>,
    } else {
    }
    %c0 = arith.constant 0 : index
    %c0_1 = arith.constant 0 : index
    %3 = vector.load %arg5[%c0, %c0_1] : memref<8x128xf32, #tpu.memory_space<vmem>>, vector<8x128xf32>
    %c0_2 = arith.constant 0 : index
    %c0_3 = arith.constant 0 : index
    %4 = vector.load %arg3[%c0_2, %c0_3] : memref<8x896xf32, #tpu.memory_space<vmem>>, vector<8x896xf32>
    %c0_4 = arith.constant 0 : index
    %c0_5 = arith.constant 0 : index
    %5 = vector.load %arg4[%c0_4, %c0_5] : memref<896x128xf32, #tpu.memory_space<vmem>>, vector<896x128xf32>
    %cst = arith.constant dense<0.000000e+00> : vector<8x128xf32>
    %6 = tpu.matmul %4, %5, %cst {dimension_numbers = #tpu.dot_dimension_numbers<[1], [0], [0], [1], [0, 0, 1, 1], [], []>} : vector<8x896xf32>, vector<896x128xf32>, vector<8x128xf32> -> vector<8x128xf32>
    %7 = arith.addf %3, %6 : vector<8x128xf32>
    %c0_6 = arith.constant 0 : index
    %c0_7 = arith.constant 0 : index
    %8 = vector.load %arg5[%c0_6, %c0_7] : memref<8x128xf32, #tpu.memory_space<vmem>>, vector<8x128xf32>
    tpu.vector_store %arg5[%c0_6, %c0_7], %7 {strides = array<i32>} : memref<8x128xf32, #tpu.memory_space<vmem>>, vector<8x128xf32>,
    return
  }
  func.func @transform_0(%arg0: i32, %arg1: i32, %arg2: i32) -> (i32, i32) {
    %c0_i32 = arith.constant 0 : i32
    return %arg0, %arg2 : i32, i32
  }
  func.func @transform_1(%arg0: i32, %arg1: i32, %arg2: i32) -> (i32, i32) {
    %c0_i32 = arith.constant 0 : i32
    return %arg2, %arg1 : i32, i32
  }
  func.func @transform_2(%arg0: i32, %arg1: i32, %arg2: i32) -> (i32, i32) {
    %c0_i32 = arith.constant 0 : i32
    return %arg0, %arg1 : i32, i32
  }
}

</mosaic_0001>

<llo_original>
// kernel: _linear_forward.1
$region0: #{_linear_forward.1}
  #allocation0 [shape = 'u32[]', space=smem, size = 0x4, offset = 0x4, fixed_abs, tag = 'smem constant byte address 0x4 - core index']
  #allocation1 [shape = 'u32[144,128]{1,0:T(1,128)}', space=vmem, size = 0x12000, scoped, tag = 'internal scratch']
  %s0 = inlined_call_operand.vmem [shape: f32[8,896], index: 0, kind: input, shape index: {}]
  %s1 = inlined_call_operand.hbm [shape: f32[896,128], index: 1, kind: input, shape index: {}]
  %s2 = inlined_call_operand.vmem [shape: f32[8,128], index: 2, kind: output, shape index: {}]
  %s3 = sld [smem:[#allocation0]]
  $region26: #{_linear_forward.1} parent=0
    _
  %s5 = ssub.s32 1, %s3
  %s6 = scalar_select 0, %s5, %s3
  $region1: #{_linear_forward.1} parent=0
    #allocation2 [shape = 'u8[458752]{0}', space=vmem, size = 0x70000, scoped, tag = 'input window, operand 1, single buffered']
    #allocation3 [shape = 's32[1]{0}', space=sflag, size = 0x4, scoped, tag = 'scoped memory for _linear_forward.1']
    %7 = vsyncpa [#allocation3], 0
    // Predicated region
    $region2: #{_linear_forward.1} parent=1 // pred_check
      _
    $region3: #{_linear_forward.1} parent=1 // pred_check_branch
      %9 = sbr.rel (0) target = $region5
    $region4: #{_linear_forward.1} parent=1 // pred_region
      _
    $region5: #{_linear_forward.1} parent=1 // pred_fallthru
      _
    // Predicated region
    $region6: #{_linear_forward.1} parent=1 // pred_check
      _
    $region7: #{_linear_forward.1} parent=1 // pred_check_branch
      %11 = sbr.rel (0) target = $region9
    $region8: #{_linear_forward.1} parent=1 // pred_region
      %s13 = ssub.s32 14336, 14336
      %14 = vsyncadd [#allocation3], %s13
      %s15 = sshll.u32 [#allocation2], 4
      %s16 = int_to_ptr.vmem [resolvable:$true] %s15
      %21 = dma.hbm_to_vmem [thread:$0]  %s1, 14336, %s16, [#allocation3], 128, 128, 8
    $region9: #{_linear_forward.1} parent=1 // pred_fallthru
      _
    // Predicated region
    $region10: #{_linear_forward.1} parent=1 // pred_check
      _
    $region11: #{_linear_forward.1} parent=1 // pred_check_branch
      %23 = sbr.rel (0) target = $region13
    $region12: #{_linear_forward.1} parent=1 // pred_region
      %24 = dma.done [#allocation3], 14336
    $region13: #{_linear_forward.1} parent=1 // pred_fallthru
      _
    %p25 = scmp.eq.s32.totalorder 0, 0
    // Predicated region
    $region14: #{_linear_forward.1} parent=1 // pred_check
      %p26 = pneg %p25
    $region15: #{_linear_forward.1} parent=1 // pred_check_branch
      %28 = sbr.rel (%p26) target = $region17
    $region16: #{_linear_forward.1} parent=1 // pred_region
      %29 = vst [vmem:[%s2] sm:$0xff] 0.0
    $region17: #{_linear_forward.1} parent=1 // pred_fallthru
      _
    %v30 = vld [vmem:[%s2] sm:$0xff]
    %v31 = vld [vmem:[%s0] sm:$0xff]
    %v32 = vld [vmem:[%s0 + $0x8] sm:$0xff]
    %v33 = vld [vmem:[%s0 + $0x10] sm:$0xff]
    %v34 = vld [vmem:[%s0 + $0x18] sm:$0xff]
    %v35 = vld [vmem:[%s0 + $0x20] sm:$0xff]
    %v36 = vld [vmem:[%s0 + $0x28] sm:$0xff]
    %v37 = vld [vmem:[%s0 + $0x30] sm:$0xff]
    %v38 = vld [vmem:[#allocation2] sm:$0xff]
    %v39 = vld [vmem:[#allocation2 + $0x8] sm:$0xff]
    %v40 = vld [vmem:[#allocation2 + $0x10] sm:$0xff]
    %v41 = vld [vmem:[#allocation2 + $0x18] sm:$0xff]
    %v42 = vld [vmem:[#allocation2 + $0x20] sm:$0xff]
    %v43 = vld [vmem:[#allocation2 + $0x28] sm:$0xff]
    %v44 = vld [vmem:[#allocation2 + $0x30] sm:$0xff]
    %v45 = vld [vmem:[#allocation2 + $0x38] sm:$0xff]
    %v46 = vld [vmem:[#allocation2 + $0x40] sm:$0xff]
    %v47 = vld [vmem:[#allocation2 + $0x48] sm:$0xff]
    %v48 = vld [vmem:[#allocation2 + $0x50] sm:$0xff]
    %v49 = vld [vmem:[#allocation2 + $0x58] sm:$0xff]
    %v50 = vld [vmem:[#allocation2 + $0x60] sm:$0xff]
    %v51 = vld [vmem:[#allocation2 + $0x68] sm:$0xff]
    %v52 = vld [vmem:[#allocation2 + $0x70] sm:$0xff]
    %v53 = vld [vmem:[#allocation2 + $0x78] sm:$0xff]
    %v54 = vld [vmem:[#allocation2 + $0x80] sm:$0xff]
    %v55 = vld [vmem:[#allocation2 + $0x88] sm:$0xff]
    %v56 = vld [vmem:[#allocation2 + $0x90] sm:$0xff]
    %v57 = vld [vmem:[#allocation2 + $0x98] sm:$0xff]
    %v58 = vld [vmem:[#allocation2 + $0xa0] sm:$0xff]
    %v59 = vld [vmem:[#allocation2 + $0xa8] sm:$0xff]
    %v60 = vld [vmem:[#allocation2 + $0xb0] sm:$0xff]
    %v61 = vld [vmem:[#allocation2 + $0xb8] sm:$0xff]
    %v62 = vld [vmem:[#allocation2 + $0xc0] sm:$0xff]
    %v63 = vld [vmem:[#allocation2 + $0xc8] sm:$0xff]
    %v64 = vld [vmem:[#allocation2 + $0xd0] sm:$0xff]
    %v65 = vld [vmem:[#allocation2 + $0xd8] sm:$0xff]
    %v66 = vld [vmem:[#allocation2 + $0xe0] sm:$0xff]
    %v67 = vld [vmem:[#allocation2 + $0xe8] sm:$0xff]
    %v68 = vld [vmem:[#allocation2 + $0xf0] sm:$0xff]
    %v69 = vld [vmem:[#allocation2 + $0xf8] sm:$0xff]
    %v70 = vld [vmem:[#allocation2 + $0x100] sm:$0xff]
    %v71 = vld [vmem:[#allocation2 + $0x108] sm:$0xff]
    %v72 = vld [vmem:[#allocation2 + $0x110] sm:$0xff]
    %v73 = vld [vmem:[#allocation2 + $0x118] sm:$0xff]
    %v74 = vld [vmem:[#allocation2 + $0x120] sm:$0xff]
    %v75 = vld [vmem:[#allocation2 + $0x128] sm:$0xff]
    %v76 = vld [vmem:[#allocation2 + $0x130] sm:$0xff]
    %v77 = vld [vmem:[#allocation2 + $0x138] sm:$0xff]
    %v78 = vld [vmem:[#allocation2 + $0x140] sm:$0xff]
    %v79 = vld [vmem:[#allocation2 + $0x148] sm:$0xff]
    %v80 = vld [vmem:[#allocation2 + $0x150] sm:$0xff]
    %v81 = vld [vmem:[#allocation2 + $0x158] sm:$0xff]
    %v82 = vld [vmem:[#allocation2 + $0x160] sm:$0xff]
    %v83 = vld [vmem:[#allocation2 + $0x168] sm:$0xff]
    %v84 = vld [vmem:[#allocation2 + $0x170] sm:$0xff]
    %v85 = vld [vmem:[#allocation2 + $0x178] sm:$0xff]
    %v86 = vld [vmem:[#allocation2 + $0x180] sm:$0xff]
    %v87 = vld [vmem:[#allocation2 + $0x188] sm:$0xff]
    %v88 = vld [vmem:[#allocation2 + $0x190] sm:$0xff]
    %v89 = vld [vmem:[#allocation2 + $0x198] sm:$0xff]
    %v90 = vld [vmem:[#allocation2 + $0x1a0] sm:$0xff]
    %v91 = vld [vmem:[#allocation2 + $0x1a8] sm:$0xff]
    %v92 = vld [vmem:[#allocation2 + $0x1b0] sm:$0xff]
    %v93 = vld [vmem:[#allocation2 + $0x1b8] sm:$0xff]
    %v94 = vld [vmem:[#allocation2 + $0x1c0] sm:$0xff]
    %v95 = vld [vmem:[#allocation2 + $0x1c8] sm:$0xff]
    %v96 = vld [vmem:[#allocation2 + $0x1d0] sm:$0xff]
    %v97 = vld [vmem:[#allocation2 + $0x1d8] sm:$0xff]
    %v98 = vld [vmem:[#allocation2 + $0x1e0] sm:$0xff]
    %v99 = vld [vmem:[#allocation2 + $0x1e8] sm:$0xff]
    %v100 = vld [vmem:[#allocation2 + $0x1f0] sm:$0xff]
    %v101 = vld [vmem:[#allocation2 + $0x1f8] sm:$0xff]
    %v102 = vld [vmem:[#allocation2 + $0x200] sm:$0xff]
    %v103 = vld [vmem:[#allocation2 + $0x208] sm:$0xff]
    %v104 = vld [vmem:[#allocation2 + $0x210] sm:$0xff]
    %v105 = vld [vmem:[#allocation2 + $0x218] sm:$0xff]
    %v106 = vld [vmem:[#allocation2 + $0x220] sm:$0xff]
    %v107 = vld [vmem:[#allocation2 + $0x228] sm:$0xff]
    %v108 = vld [vmem:[#allocation2 + $0x230] sm:$0xff]
    %v109 = vld [vmem:[#allocation2 + $0x238] sm:$0xff]
    %v110 = vld [vmem:[#allocation2 + $0x240] sm:$0xff]
    %v111 = vld [vmem:[#allocation2 + $0x248] sm:$0xff]
    %v112 = vld [vmem:[#allocation2 + $0x250] sm:$0xff]
    %v113 = vld [vmem:[#allocation2 + $0x258] sm:$0xff]
    %v114 = vld [vmem:[#allocation2 + $0x260] sm:$0xff]
    %v115 = vld [vmem:[#allocation2 + $0x268] sm:$0xff]
    %v116 = vld [vmem:[#allocation2 + $0x270] sm:$0xff]
    %v117 = vld [vmem:[#allocation2 + $0x278] sm:$0xff]
    %v118 = vld [vmem:[#allocation2 + $0x280] sm:$0xff]
    %v119 = vld [vmem:[#allocation2 + $0x288] sm:$0xff]
    %v120 = vld [vmem:[#allocation2 + $0x290] sm:$0xff]
    %v121 = vld [vmem:[#allocation2 + $0x298] sm:$0xff]
    %v122 = vld [vmem:[#allocation2 + $0x2a0] sm:$0xff]
    %v123 = vld [vmem:[#allocation2 + $0x2a8] sm:$0xff]
    %v124 = vld [vmem:[#allocation2 + $0x2b0] sm:$0xff]
    %v125 = vld [vmem:[#allocation2 + $0x2b8] sm:$0xff]
    %v126 = vld [vmem:[#allocation2 + $0x2c0] sm:$0xff]
    %v127 = vld [vmem:[#allocation2 + $0x2c8] sm:$0xff]
    %v128 = vld [vmem:[#allocation2 + $0x2d0] sm:$0xff]
    %v129 = vld [vmem:[#allocation2 + $0x2d8] sm:$0xff]
    %v130 = vld [vmem:[#allocation2 + $0x2e0] sm:$0xff]
    %v131 = vld [vmem:[#allocation2 + $0x2e8] sm:$0xff]
    %v132 = vld [vmem:[#allocation2 + $0x2f0] sm:$0xff]
    %v133 = vld [vmem:[#allocation2 + $0x2f8] sm:$0xff]
    %v134 = vld [vmem:[#allocation2 + $0x300] sm:$0xff]
    %v135 = vld [vmem:[#allocation2 + $0x308] sm:$0xff]
    %v136 = vld [vmem:[#allocation2 + $0x310] sm:$0xff]
    %v137 = vld [vmem:[#allocation2 + $0x318] sm:$0xff]
    %v138 = vld [vmem:[#allocation2 + $0x320] sm:$0xff]
    %v139 = vld [vmem:[#allocation2 + $0x328] sm:$0xff]
    %v140 = vld [vmem:[#allocation2 + $0x330] sm:$0xff]
    %v141 = vld [vmem:[#allocation2 + $0x338] sm:$0xff]
    %v142 = vld [vmem:[#allocation2 + $0x340] sm:$0xff]
    %v143 = vld [vmem:[#allocation2 + $0x348] sm:$0xff]
    %v144 = vld [vmem:[#allocation2 + $0x350] sm:$0xff]
    %v145 = vld [vmem:[#allocation2 + $0x358] sm:$0xff]
    %v146 = vld [vmem:[#allocation2 + $0x360] sm:$0xff]
    %v147 = vld [vmem:[#allocation2 + $0x368] sm:$0xff]
    %v148 = vld [vmem:[#allocation2 + $0x370] sm:$0xff]
    %v149 = vld [vmem:[#allocation2 + $0x378] sm:$0xff]
    %150 = vmatprep.subr.mxu0 0.0
    %151 = vmatpush1.msra.mxu0 %v38
    %152 = vmatprep.subr.mxu0 0.0
    %153 = vmatpush1.msra.mxu0 %v39
    %154 = vmatprep.subr.mxu0 0.0
    %155 = vmatpush1.msra.mxu0 %v40
    %156 = vmatprep.subr.mxu0 0.0
    %157 = vmatpush1.msra.mxu0 %v41
    %158 = vmatprep.subr.mxu0 0.0
    %159 = vmatpush1.msra.mxu0 %v42
    %160 = vmatprep.subr.mxu0 0.0
    %161 = vmatpush1.msra.mxu0 %v43
    %162 = vmatprep.subr.mxu0 0.0
    %163 = vmatpush1.msra.mxu0 %v44
    %164 = vmatprep.subr.mxu0 0.0
    %165 = vmatpush1.msra.mxu0 %v45
    %166 = vmatprep.subr.mxu0 0.0
    %167 = vmatpush1.msra.mxu0 %v46
    %168 = vmatprep.subr.mxu0 0.0
    %169 = vmatpush1.msra.mxu0 %v47
    %170 = vmatprep.subr.mxu0 0.0
    %171 = vmatpush1.msra.mxu0 %v48
    %172 = vmatprep.subr.mxu0 0.0
    %173 = vmatpush1.msra.mxu0 %v49
    %174 = vmatprep.subr.mxu0 0.0
    %175 = vmatpush1.msra.mxu0 %v50
    %176 = vmatprep.subr.mxu0 0.0
    %177 = vmatpush1.msra.mxu0 %v51
    %178 = vmatprep.subr.mxu0 0.0
    %179 = vmatpush1.msra.mxu0 %v52
    %180 = vmatprep.subr.mxu0 0.0
    %181 = vmatpush1.msra.mxu0 %v53
    %182 = vmatprep.subr.mxu0 0.0
    %183 = vmatpush1.msra.mxu0 %v54
    %184 = vmatprep.subr.mxu0 0.0
    %185 = vmatpush1.msra.mxu0 %v55
    %186 = vmatprep.subr.mxu0 0.0
    %187 = vmatpush1.msra.mxu0 %v56
    %188 = vmatprep.subr.mxu0 0.0
    %189 = vmatpush1.msra.mxu0 %v57
    %190 = vmatprep.subr.mxu0 0.0
    %191 = vmatpush1.msra.mxu0 %v58
    %192 = vmatprep.subr.mxu0 0.0
    %193 = vmatpush1.msra.mxu0 %v59
    %194 = vmatprep.subr.mxu0 0.0
    %195 = vmatpush1.msra.mxu0 %v60
    %196 = vmatprep.subr.mxu0 0.0
    %197 = vmatpush1.msra.mxu0 %v61
    %198 = vmatprep.subr.mxu0 0.0
    %199 = vmatpush1.msra.mxu0 %v62
    %200 = vmatprep.subr.mxu0 0.0
    %201 = vmatpush1.msra.mxu0 %v63
    %202 = vmatprep.subr.mxu0 0.0
    %203 = vmatpush1.msra.mxu0 %v64
    %204 = vmatprep.subr.mxu0 0.0
    %205 = vmatpush1.msra.mxu0 %v65
    %206 = vmatprep.subr.mxu0 0.0
    %207 = vmatpush1.msra.mxu0 %v66
    %208 = vmatprep.subr.mxu0 0.0
    %209 = vmatpush1.msra.mxu0 %v67
    %210 = vmatprep.subr.mxu0 0.0
    %211 = vmatpush1.msra.mxu0 %v68
    %212 = vmatprep.subr.mxu0 0.0
    %213 = vmatpush1.msra.mxu0 %v69
    %214 = vmatprep.mubr.f32.mxu0 %v32
    %215 = vmatmul.mubr.f32.gmra.mrb[0].mxu0 %v31
    %v216 = vpop.f32.mrb[0].mxu0
    %v217 = vadd.f32 0.0, %v216
    %v218 = vpop.f32.mrb[0].mxu0
    %219 = vdwg.mxu0
    %220 = vmatprep.subr.mxu0 0.0
    %221 = vmatpush1.msra.mxu0 %v70
    %222 = vmatprep.subr.mxu0 0.0
    %223 = vmatpush1.msra.mxu0 %v71
    %224 = vmatprep.subr.mxu0 0.0
    %225 = vmatpush1.msra.mxu0 %v72
    %226 = vmatprep.subr.mxu0 0.0
    %227 = vmatpush1.msra.mxu0 %v73
    %228 = vmatprep.subr.mxu0 0.0
    %229 = vmatpush1.msra.mxu0 %v74
    %230 = vmatprep.subr.mxu0 0.0
    %231 = vmatpush1.msra.mxu0 %v75
    %232 = vmatprep.subr.mxu0 0.0
    %233 = vmatpush1.msra.mxu0 %v76
    %234 = vmatprep.subr.mxu0 0.0
    %235 = vmatpush1.msra.mxu0 %v77
    %236 = vmatprep.subr.mxu0 0.0
    %237 = vmatpush1.msra.mxu0 %v78
    %238 = vmatprep.subr.mxu0 0.0
    %239 = vmatpush1.msra.mxu0 %v79
    %240 = vmatprep.subr.mxu0 0.0
    %241 = vmatpush1.msra.mxu0 %v80
    %242 = vmatprep.subr.mxu0 0.0
    %243 = vmatpush1.msra.mxu0 %v81
    %244 = vmatprep.subr.mxu0 0.0
    %245 = vmatpush1.msra.mxu0 %v82
    %246 = vmatprep.subr.mxu0 0.0
    %247 = vmatpush1.msra.mxu0 %v83
    %248 = vmatprep.subr.mxu0 0.0
    %249 = vmatpush1.msra.mxu0 %v84
    %250 = vmatprep.subr.mxu0 0.0
    %251 = vmatpush1.msra.mxu0 %v85
    %252 = vmatprep.subr.mxu0 0.0
    %253 = vmatpush1.msra.mxu0 %v86
    %254 = vmatprep.subr.mxu0 0.0
    %255 = vmatpush1.msra.mxu0 %v87
    %256 = vmatprep.subr.mxu0 0.0
    %257 = vmatpush1.msra.mxu0 %v88
    %258 = vmatprep.subr.mxu0 0.0
    %259 = vmatpush1.msra.mxu0 %v89
    %260 = vmatprep.subr.mxu0 0.0
    %261 = vmatpush1.msra.mxu0 %v90
    %262 = vmatprep.subr.mxu0 0.0
    %263 = vmatpush1.msra.mxu0 %v91
    %264 = vmatprep.subr.mxu0 0.0
    %265 = vmatpush1.msra.mxu0 %v92
    %266 = vmatprep.subr.mxu0 0.0
    %267 = vmatpush1.msra.mxu0 %v93
    %268 = vmatprep.subr.mxu0 0.0
    %269 = vmatpush1.msra.mxu0 %v94
    %270 = vmatprep.subr.mxu0 0.0
    %271 = vmatpush1.msra.mxu0 %v95
    %272 = vmatprep.subr.mxu0 0.0
    %273 = vmatpush1.msra.mxu0 %v96
    %274 = vmatprep.subr.mxu0 0.0
    %275 = vmatpush1.msra.mxu0 %v97
    %276 = vmatprep.subr.mxu0 0.0
    %277 = vmatpush1.msra.mxu0 %v98
    %278 = vmatprep.subr.mxu0 0.0
    %279 = vmatpush1.msra.mxu0 %v99
    %280 = vmatprep.subr.mxu0 0.0
    %281 = vmatpush1.msra.mxu0 %v100
    %282 = vmatprep.subr.mxu0 0.0
    %283 = vmatpush1.msra.mxu0 %v101
    %284 = vmatprep.mubr.f32.mxu0 %v34
    %285 = vmatmul.mubr.f32.gmra.mrb[0].mxu0 %v33
    %v286 = vpop.f32.mrb[0].mxu0
    %v287 = vadd.f32 %v217, %v286
    %v288 = vpop.f32.mrb[0].mxu0
    %289 = vdwg.mxu0
    %290 = vmatprep.subr.mxu0 0.0
    %291 = vmatpush1.msra.mxu0 %v102
    %292 = vmatprep.subr.mxu0 0.0
    %293 = vmatpush1.msra.mxu0 %v103
    %294 = vmatprep.subr.mxu0 0.0
    %295 = vmatpush1.msra.mxu0 %v104
    %296 = vmatprep.subr.mxu0 0.0
    %297 = vmatpush1.msra.mxu0 %v105
    %298 = vmatprep.subr.mxu0 0.0
    %299 = vmatpush1.msra.mxu0 %v106
    %300 = vmatprep.subr.mxu0 0.0
    %301 = vmatpush1.msra.mxu0 %v107
    %302 = vmatprep.subr.mxu0 0.0
    %303 = vmatpush1.msra.mxu0 %v108
    %304 = vmatprep.subr.mxu0 0.0
    %305 = vmatpush1.msra.mxu0 %v109
    %306 = vmatprep.subr.mxu0 0.0
    %307 = vmatpush1.msra.mxu0 %v110
    %308 = vmatprep.subr.mxu0 0.0
    %309 = vmatpush1.msra.mxu0 %v111
    %310 = vmatprep.subr.mxu0 0.0
    %311 = vmatpush1.msra.mxu0 %v112
    %312 = vmatprep.subr.mxu0 0.0
    %313 = vmatpush1.msra.mxu0 %v113
    %314 = vmatprep.subr.mxu0 0.0
    %315 = vmatpush1.msra.mxu0 %v114
    %316 = vmatprep.subr.mxu0 0.0
    %317 = vmatpush1.msra.mxu0 %v115
    %318 = vmatprep.subr.mxu0 0.0
    %319 = vmatpush1.msra.mxu0 %v116
    %320 = vmatprep.subr.mxu0 0.0
    %321 = vmatpush1.msra.mxu0 %v117
    %322 = vmatprep.subr.mxu0 0.0
    %323 = vmatpush1.msra.mxu0 %v118
    %324 = vmatprep.subr.mxu0 0.0
    %325 = vmatpush1.msra.mxu0 %v119
    %326 = vmatprep.subr.mxu0 0.0
    %327 = vmatpush1.msra.mxu0 %v120
    %328 = vmatprep.subr.mxu0 0.0
    %329 = vmatpush1.msra.mxu0 %v121
    %330 = vmatprep.subr.mxu0 0.0
    %331 = vmatpush1.msra.mxu0 %v122
    %332 = vmatprep.subr.mxu0 0.0
    %333 = vmatpush1.msra.mxu0 %v123
    %334 = vmatprep.subr.mxu0 0.0
    %335 = vmatpush1.msra.mxu0 %v124
    %336 = vmatprep.subr.mxu0 0.0
    %337 = vmatpush1.msra.mxu0 %v125
    %338 = vmatprep.subr.mxu0 0.0
    %339 = vmatpush1.msra.mxu0 %v126
    %340 = vmatprep.subr.mxu0 0.0
    %341 = vmatpush1.msra.mxu0 %v127
    %342 = vmatprep.subr.mxu0 0.0
    %343 = vmatpush1.msra.mxu0 %v128
    %344 = vmatprep.subr.mxu0 0.0
    %345 = vmatpush1.msra.mxu0 %v129
    %346 = vmatprep.subr.mxu0 0.0
    %347 = vmatpush1.msra.mxu0 %v130
    %348 = vmatprep.subr.mxu0 0.0
    %349 = vmatpush1.msra.mxu0 %v131
    %350 = vmatprep.subr.mxu0 0.0
    %351 = vmatpush1.msra.mxu0 %v132
    %352 = vmatprep.subr.mxu0 0.0
    %353 = vmatpush1.msra.mxu0 %v133
    %354 = vmatprep.mubr.f32.mxu0 %v36
    %355 = vmatmul.mubr.f32.gmra.mrb[0].mxu0 %v35
    %v356 = vpop.f32.mrb[0].mxu0
    %v357 = vadd.f32 %v287, %v356
    %v358 = vpop.f32.mrb[0].mxu0
    %359 = vdwg.mxu0
    %360 = vmatprep.subr.mxu0 0.0
    %361 = vmatpush1.msra.mxu0 %v134
    %362 = vmatprep.subr.mxu0 0.0
    %363 = vmatpush1.msra.mxu0 %v135
    %364 = vmatprep.subr.mxu0 0.0
    %365 = vmatpush1.msra.mxu0 %v136
    %366 = vmatprep.subr.mxu0 0.0
    %367 = vmatpush1.msra.mxu0 %v137
    %368 = vmatprep.subr.mxu0 0.0
    %369 = vmatpush1.msra.mxu0 %v138
    %370 = vmatprep.subr.mxu0 0.0
    %371 = vmatpush1.msra.mxu0 %v139
    %372 = vmatprep.subr.mxu0 0.0
    %373 = vmatpush1.msra.mxu0 %v140
    %374 = vmatprep.subr.mxu0 0.0
    %375 = vmatpush1.msra.mxu0 %v141
    %376 = vmatprep.subr.mxu0 0.0
    %377 = vmatpush1.msra.mxu0 %v142
    %378 = vmatprep.subr.mxu0 0.0
    %379 = vmatpush1.msra.mxu0 %v143
    %380 = vmatprep.subr.mxu0 0.0
    %381 = vmatpush1.msra.mxu0 %v144
    %382 = vmatprep.subr.mxu0 0.0
    %383 = vmatpush1.msra.mxu0 %v145
    %384 = vmatprep.subr.mxu0 0.0
    %385 = vmatpush1.msra.mxu0 %v146
    %386 = vmatprep.subr.mxu0 0.0
    %387 = vmatpush1.msra.mxu0 %v147
    %388 = vmatprep.subr.mxu0 0.0
    %389 = vmatpush1.msra.mxu0 %v148
    %390 = vmatprep.subr.mxu0 0.0
    %391 = vmatpush1.msra.mxu0 %v149
    %392 = vmatprep.subr.mxu0 0.0
    %393 = vmatpush1.msra.mxu0 0.0
    %394 = vmatprep.subr.mxu0 0.0
    %395 = vmatpush1.msra.mxu0 0.0
    %396 = vmatprep.subr.mxu0 0.0
    %397 = vmatpush1.msra.mxu0 0.0
    %398 = vmatprep.subr.mxu0 0.0
    %399 = vmatpush1.msra.mxu0 0.0
    %400 = vmatprep.subr.mxu0 0.0
    %401 = vmatpush1.msra.mxu0 0.0
    %402 = vmatprep.subr.mxu0 0.0
    %403 = vmatpush1.msra.mxu0 0.0
    %404 = vmatprep.subr.mxu0 0.0
    %405 = vmatpush1.msra.mxu0 0.0
    %406 = vmatprep.subr.mxu0 0.0
    %407 = vmatpush1.msra.mxu0 0.0
    %408 = vmatprep.subr.mxu0 0.0
    %409 = vmatpush1.msra.mxu0 0.0
    %410 = vmatprep.subr.mxu0 0.0
    %411 = vmatpush1.msra.mxu0 0.0
    %412 = vmatprep.subr.mxu0 0.0
    %413 = vmatpush1.msra.mxu0 0.0
    %414 = vmatprep.subr.mxu0 0.0
    %415 = vmatpush1.msra.mxu0 0.0
    %416 = vmatprep.subr.mxu0 0.0
    %417 = vmatpush1.msra.mxu0 0.0
    %418 = vmatprep.subr.mxu0 0.0
    %419 = vmatpush1.msra.mxu0 0.0
    %420 = vmatprep.subr.mxu0 0.0
    %421 = vmatpush1.msra.mxu0 0.0
    %422 = vmatprep.subr.mxu0 0.0
    %423 = vmatpush1.msra.mxu0 0.0
    %424 = vmatprep.mubr.f32.mxu0 0.0
    %425 = vmatmul.mubr.f32.gmra.mrb[0].mxu0 %v37
    %v426 = vpop.f32.mrb[0].mxu0
    %v427 = vadd.f32 %v357, %v426
    %v428 = vpop.f32.mrb[0].mxu0
    %429 = vdwg.mxu0
    %v430 = vadd.f32 %v30, %v427
    %431 = vst [vmem:[%s2] sm:$0xff] %v430
    // Predicated region
    $region18: #{_linear_forward.1} parent=1 // pred_check
      _
    $region19: #{_linear_forward.1} parent=1 // pred_check_branch
      %433 = sbr.rel (0) target = $region21
    $region20: #{_linear_forward.1} parent=1 // pred_region
      _
    $region21: #{_linear_forward.1} parent=1 // pred_fallthru
      _
    // Predicated region
    $region22: #{_linear_forward.1} parent=1 // pred_check
      _
    $region23: #{_linear_forward.1} parent=1 // pred_check_branch
      %435 = sbr.rel (0) target = $region25
    $region24: #{_linear_forward.1} parent=1 // pred_region
      _
    $region25: #{_linear_forward.1} parent=1 // pred_fallthru
      _
    %436 = vsyncpa [#allocation3], 1

</llo_original>
